<compile_context>
chip_gen: v7x
topology: tpu7x:2x2x1
jax: 0.10.0
libtpu: 0.0.40
codegen_flags: <defaults>
</compile_context>

<pallas_src>
import functools

import jax
import jax.numpy as jnp
from jax.experimental import pallas as pl
from jax.experimental.pallas import tpu as pltpu

LANE = 128


def _round_up(x, m):
    return ((x + m - 1) // m) * m


# ----------------------------------------------------------------------------- kernel
def _transition_kernel(z_dim, oa_ref, eps_ref, w1_ref, wstack_ref, bstack_ref,
                       enc_ref, dec_ref):
    f32 = jnp.float32
    cdt = w1_ref.dtype  # matmul operand dtype (f32 or bf16); accumulation is f32

    bias = lambda k: bstack_ref[k:k + 1, :]

    # Fused first layer: [o|a] @ (folded o/a encoders + z_encoder layer 1).
    h = jnp.dot(oa_ref[...], w1_ref[...], preferred_element_type=f32)
    h = jnp.maximum(h + bias(0), 0.0).astype(cdt)

    # z_encoder layer 2.
    h = jnp.maximum(
        jnp.dot(h, wstack_ref[0], preferred_element_type=f32) + bias(1), 0.0
    ).astype(cdt)

    # Fused encoder head: one matmul; lanes [z_mu | z_logstd | 0...].
    enc = jnp.dot(h, wstack_ref[1], preferred_element_type=f32) + bias(2)
    enc_ref[...] = enc

    # rsample feeding the decoder (no unaligned lane slicing, no roll):
    #   lanes 0:z        -> z_mu
    #   lanes z:2z       -> exp(z_logstd) * eps   (wrapper placed eps at lanes z:2z)
    # wd1's rows are duplicated for lanes 0:z and z:2z, so the first decoder matmul
    # computes (z_mu + std*eps) @ wd1 exactly.
    lane = jax.lax.broadcasted_iota(jnp.int32, enc.shape, 1)
    v = jnp.where(lane < z_dim, enc, jnp.exp(enc) * eps_ref[...]).astype(cdt)

    # z_decoder MLP.
    d = jnp.maximum(
        jnp.dot(v, wstack_ref[2], preferred_element_type=f32) + bias(3), 0.0
    ).astype(cdt)
    d = jnp.maximum(
        jnp.dot(d, wstack_ref[3], preferred_element_type=f32) + bias(4), 0.0
    ).astype(cdt)

    # Fused decoder head: one matmul; lanes [o_mu | o_logstd | 0...].
    dec_ref[...] = jnp.dot(d, wstack_ref[4], preferred_element_type=f32) + bias(5)


# ----------------------------------------------------------------------------- params
def init_params(key, obs_dim, act_dim, z_dim, hidden_dims=(128, 128)):
    """Deterministic synthetic parameters (PyTorch-like fan-in scaling)."""
    h0, h1 = hidden_dims
    half = h0 // 2
    shapes = {
        "wo": (obs_dim, half), "bo": (1, half),
        "wa": (act_dim, half), "ba": (1, half),
        "we1": (h0, h0), "be1": (1, h0),
        "we2": (h0, h1), "be2": (1, h1),
        "we3": (h1, 2 * z_dim), "be3": (1, 2 * z_dim),
        "wd1": (z_dim, h0), "bd1": (1, h0),
        "wd2": (h0, h1), "bd2": (1, h1),
        "wd3": (h1, 2 * obs_dim), "bd3": (1, 2 * obs_dim),
    }
    params = {}
    keys = jax.random.split(key, len(shapes))
    for k, (name, shape) in zip(keys, sorted(shapes.items())):
        fan_in = shape[0] if name.startswith("w") else shape[1]
        scale = 1.0 / jnp.sqrt(jnp.float32(fan_in))
        params[name] = scale * jax.random.normal(k, shape, jnp.float32)
    return params


def pack_params(p, *, obs_dim, act_dim, z_dim, hidden_dims=(128, 128),
                param_dtype=jnp.float32):
    """Fold o/a encoders into layer 1, pad+fuse heads, dup wd1 rows, stack weights."""
    h0, h1 = hidden_dims
    assert h0 == LANE and h1 == LANE, "kernel packing assumes 128-wide hidden layers"
    assert 2 * z_dim <= LANE and 2 * obs_dim <= LANE
    half = h0 // 2
    f32 = jnp.float32

    def padc(w):  # zero-pad columns (output lanes) to LANE
        return jnp.pad(w.astype(f32), ((0, 0), (0, LANE - w.shape[1])))

    # Fold mlp_o / mlp_a (no activation between) into z_encoder layer 1.
    we1 = p["we1"].astype(f32)
    wo1 = p["wo"].astype(f32) @ we1[:half]                       # [obs_dim, 128]
    wa1 = p["wa"].astype(f32) @ we1[half:]                       # [act_dim, 128]
    w1 = jnp.concatenate([wo1, wa1], axis=0)                     # [obs+act, 128]
    b1 = (p["bo"].astype(f32) @ we1[:half]
          + p["ba"].astype(f32) @ we1[half:] + p["be1"].astype(f32))

    # Fused heads: original 2*dim weights, zero-padded to 128 output lanes.
    wenc, benc = padc(p["we3"]), padc(p["be3"])                  # [z_mu | z_logstd | 0]
    wdec, bdec = padc(p["wd3"]), padc(p["bd3"])                  # [o_mu | o_logstd | 0]

    # Decoder layer 1: duplicate rows for lanes 0:z and z:2z, zero the rest.
    wd1 = p["wd1"].astype(f32)
    wd1_dup = jnp.concatenate([wd1, wd1], axis=0)                # [2*z_dim, 128]
    wd1_packed = jnp.pad(wd1_dup, ((0, LANE - 2 * z_dim), (0, 0)))

    wstack = jnp.stack([p["we2"].astype(f32), wenc, wd1_packed,
                        p["wd2"].astype(f32), wdec]).astype(param_dtype)   # (5,128,128)
    bstack = jnp.concatenate([b1, p["be2"].astype(f32), benc,
                              p["bd1"].astype(f32), p["bd2"].astype(f32), bdec],
                             axis=0).astype(f32)                           # (6,128)
    return dict(w1=w1.astype(param_dtype), wstack=wstack, bstack=bstack)


# ----------------------------------------------------------------------------- wrapper
def transition_latent_forward(o, a, eps, packed, *, obs_dim, act_dim, z_dim,
                              batch_tile=512, param_dtype=jnp.float32):
    f32 = jnp.float32
    B = o.shape[0]
    is_bf16 = jnp.dtype(param_dtype) == jnp.dtype(jnp.bfloat16)
    sub = 16 if is_bf16 else 8  # bf16 sublane packing

    # Batch tiling: tb multiple of `sub`; guarantee >=2 grid steps for medium
    # batches so dimension_semantics=("parallel",) can use both v7x TensorCores.
    tb = max(sub, _round_up(batch_tile, sub))
    if B <= tb:
        if B > 2 * sub:
            tb = _round_up((B + 1) // 2, sub)
        else:
            tb = max(sub, _round_up(B, sub))
    bp = _round_up(B, tb)
    nb = bp // tb

    # Single fused input stream [o | a]; eps placed at lanes z_dim:2*z_dim (zeros
    # elsewhere) so the in-kernel rsample needs no lane-unaligned slicing.
    oa = jnp.concatenate([o, a], axis=-1).astype(param_dtype)
    oa_p = jnp.pad(oa, ((0, bp - B), (0, 0)))
    eps_p = jnp.pad(eps.astype(f32), ((0, bp - B), (z_dim, LANE - 2 * z_dim)))

    w1, wstack, bstack = packed["w1"], packed["wstack"], packed["bstack"]
    in_dim = oa_p.shape[1]
    itemsize = jnp.dtype(param_dtype).itemsize

    # Cost estimate: 6 matmuls per row, one full-vreg exp, in/out/weight bytes.
    flops = 2 * bp * (in_dim * LANE + 5 * LANE * LANE)
    transcendentals = bp * LANE
    weight_bytes = (in_dim * LANE + 5 * LANE * LANE) * itemsize + 6 * LANE * 4
    bytes_accessed = (bp * in_dim * itemsize + bp * LANE * 4      # oa + eps reads
                      + weight_bytes                              # weights/biases
                      + 2 * bp * LANE * 4)                        # enc/dec writes
    cost = pl.CostEstimate(flops=flops, transcendentals=transcendentals,
                           bytes_accessed=bytes_accessed)

    # Only set an explicit VMEM limit if the double-buffered working set would
    # approach v5e's 16 MiB default scoped VMEM (moot at these tile sizes).
    io_per_step = tb * in_dim * itemsize + 3 * tb * LANE * 4
    vmem_est = 2 * io_per_step + 2 * weight_bytes
    vmem_limit = None
    if vmem_est > 12 * 1024 * 1024:
        vmem_limit = min(2 * vmem_est, 48 * 1024 * 1024)

    enc_out, dec_out = pl.pallas_call(
        functools.partial(_transition_kernel, z_dim),
        out_shape=(jax.ShapeDtypeStruct((bp, LANE), f32),
                   jax.ShapeDtypeStruct((bp, LANE), f32)),
        grid=(nb,),
        in_specs=[
            pl.BlockSpec((tb, in_dim), lambda i: (i, 0)),
            pl.BlockSpec((tb, LANE), lambda i: (i, 0)),
            # Constant index_map -> weights DMA'd once, VMEM-resident across steps.
            pl.BlockSpec(w1.shape, lambda i: (0, 0)),
            pl.BlockSpec(wstack.shape, lambda i: (0, 0, 0)),
            pl.BlockSpec(bstack.shape, lambda i: (0, 0)),
        ],
        out_specs=(pl.BlockSpec((tb, LANE), lambda i: (i, 0)),
                   pl.BlockSpec((tb, LANE), lambda i: (i, 0))),
        compiler_params=pltpu.CompilerParams(
            dimension_semantics=("parallel",),
            vmem_limit_bytes=vmem_limit),
        cost_estimate=cost,
    )(oa_p, eps_p, w1, wstack, bstack)

    # Cheap post-processing on the tiny sliced arrays (std / rsample recompute).
    enc_out = enc_out[:B]
    dec_out = dec_out[:B]
    z_mu = enc_out[:, :z_dim]
    z_std = jnp.exp(enc_out[:, z_dim:2 * z_dim])
    z = z_mu + z_std * eps.astype(f32)
    o_mu = dec_out[:, :obs_dim]
    o_std = jnp.exp(dec_out[:, obs_dim:2 * obs_dim])
    return z_mu, z_std, z, o_mu, o_std


# ----------------------------------------------------------------------------- reference
def reference_forward(o, a, eps, p, *, obs_dim, act_dim, z_dim):
    relu = lambda x: jnp.maximum(x, 0.0)
    o_enc = o @ p["wo"] + p["bo"]
    a_enc = a @ p["wa"] + p["ba"]
    h = jnp.concatenate([o_enc, a_enc], -1)
    h = relu(h @ p["we1"] + p["be1"])
    h = relu(h @ p["we2"] + p["be2"])
    enc = h @ p["we3"] + p["be3"]
    z_mu, z_logstd = enc[:, :z_dim], enc[:, z_dim:]
    z_std = jnp.exp(z_logstd)
    z = z_mu + z_std * eps
    d = relu(z @ p["wd1"] + p["bd1"])
    d = relu(d @ p["wd2"] + p["bd2"])
    dec = d @ p["wd3"] + p["bd3"]
    return z_mu, z_std, z, dec[:, :obs_dim], jnp.exp(dec[:, obs_dim:])


# ----------------------------------------------------------------------------- main
if __name__ == "__main__":
    obs_dim, act_dim, z_dim = 16, 8, 8
    hidden_dims = (128, 128)

    root = jax.random.PRNGKey(0)
    k_params, k_o, k_a, k_eps = jax.random.split(root, 4)
    params = init_params(k_params, obs_dim, act_dim, z_dim, hidden_dims)
    packed_f32 = pack_params(params, obs_dim=obs_dim, act_dim=act_dim, z_dim=z_dim,
                             hidden_dims=hidden_dims, param_dtype=jnp.float32)

    # --- small-batch f32 check (bs=8, single grid step) ---
    bs = 8
    o = jax.random.normal(k_o, (bs, obs_dim), jnp.float32)
    a = jax.random.normal(k_a, (bs, act_dim), jnp.float32)
    eps = jax.random.normal(k_eps, (bs, z_dim), jnp.float32)  # rsample noise
    outs = jax.block_until_ready(
        transition_latent_forward(o, a, eps, packed_f32,
                                  obs_dim=obs_dim, act_dim=act_dim, z_dim=z_dim))
    ref = reference_forward(o, a, eps, params,
                            obs_dim=obs_dim, act_dim=act_dim, z_dim=z_dim)
    for got, want in zip(outs, ref):
        assert got.shape == want.shape
        assert jnp.allclose(got, want, atol=1e-3, rtol=1e-3)

    # --- batched f32 check (non-multiple batch -> >=2 grid steps + padding) ---
    bs2 = 300
    k_o2, k_a2, k_e2 = jax.random.split(jax.random.PRNGKey(1), 3)
    o2 = jax.random.normal(k_o2, (bs2, obs_dim), jnp.float32)
    a2 = jax.random.normal(k_a2, (bs2, act_dim), jnp.float32)
    eps2 = jax.random.normal(k_e2, (bs2, z_dim), jnp.float32)
    outs2 = jax.block_until_ready(
        transition_latent_forward(o2, a2, eps2, packed_f32,
                                  obs_dim=obs_dim, act_dim=act_dim, z_dim=z_dim,
                                  batch_tile=512))
    ref2 = reference_forward(o2, a2, eps2, params,
                             obs_dim=obs_dim, act_dim=act_dim, z_dim=z_dim)
    for got, want in zip(outs2, ref2):
        assert got.shape == want.shape
        assert jnp.allclose(got, want, atol=1e-3, rtol=1e-3)

    # --- bf16 matmul path (v6e/v7x-friendly): f32 accumulation + elementwise,
    #     validated against the f32 reference with a loose tolerance ---
    packed_bf16 = pack_params(params, obs_dim=obs_dim, act_dim=act_dim, z_dim=z_dim,
                              hidden_dims=hidden_dims, param_dtype=jnp.bfloat16)
    outs_bf16 = jax.block_until_ready(
        transition_latent_forward(o2, a2, eps2, packed_bf16,
                                  obs_dim=obs_dim, act_dim=act_dim, z_dim=z_dim,
                                  batch_tile=512, param_dtype=jnp.bfloat16))
    for got, want in zip(outs_bf16, ref2):
        assert got.shape == want.shape
        assert bool(jnp.all(jnp.isfinite(got)))
        assert jnp.allclose(got, want, atol=2e-1, rtol=2e-1)

    # TODO(synk): torch.distributions.Independent(Normal) objects have no Pallas
    # equivalent; the kernel returns (mu, std) and the reparameterized sample z,
    # which fully determine the distributions.
    print("KERNEL_OK")
</pallas_src>

<mosaic_0001>
module attributes {stable_mosaic.version = 11 : i64} {
  func.func @_transition_kernel(%arg0: i32, %arg1: memref<8x24xf32, #tpu.memory_space<vmem>>, %arg2: memref<8x128xf32, #tpu.memory_space<vmem>>, %arg3: memref<24x128xf32, #tpu.memory_space<vmem>>, %arg4: memref<5x128x128xf32, #tpu.memory_space<vmem>>, %arg5: memref<6x128xf32, #tpu.memory_space<vmem>>, %arg6: memref<8x128xf32, #tpu.memory_space<vmem>>, %arg7: memref<8x128xf32, #tpu.memory_space<vmem>>) attributes {dimension_semantics = [#tpu.dimension_semantics<parallel>], iteration_bounds = array<i64: 1>, scalar_prefetch = 0 : i64, scratch_operands = 0 : i64, tpu.core_type = #tpu.core_type<tc>, window_params = [{transform_indices = @transform_0, window_bounds = array<i64: 8, 24>}, {transform_indices = @transform_1, window_bounds = array<i64: 8, 128>}, {pipeline_mode = #tpu.pipeline_mode<synchronous>, transform_indices = @transform_2, window_bounds = array<i64: 24, 128>}, {pipeline_mode = #tpu.pipeline_mode<synchronous>, transform_indices = @transform_3, window_bounds = array<i64: 5, 128, 128>}, {pipeline_mode = #tpu.pipeline_mode<synchronous>, transform_indices = @transform_4, window_bounds = array<i64: 6, 128>}, {transform_indices = @transform_5, window_bounds = array<i64: 8, 128>}, {transform_indices = @transform_6, window_bounds = array<i64: 8, 128>}]} {
    %c0 = arith.constant 0 : index
    %c0_0 = arith.constant 0 : index
    %0 = vector.load %arg1[%c0, %c0_0] : memref<8x24xf32, #tpu.memory_space<vmem>>, vector<8x24xf32>
    %c0_1 = arith.constant 0 : index
    %c0_2 = arith.constant 0 : index
    %1 = vector.load %arg3[%c0_1, %c0_2] : memref<24x128xf32, #tpu.memory_space<vmem>>, vector<24x128xf32>
    %cst = arith.constant dense<0.000000e+00> : vector<8x128xf32>
    %2 = tpu.matmul %0, %1, %cst {dimension_numbers = #tpu.dot_dimension_numbers<[1], [0], [0], [1], [0, 0, 1, 1], [], []>} : vector<8x24xf32>, vector<24x128xf32>, vector<8x128xf32> -> vector<8x128xf32>
    %c0_3 = arith.constant 0 : index
    %c0_4 = arith.constant 0 : index
    %3 = vector.load %arg5[%c0_3, %c0_4] : memref<6x128xf32, #tpu.memory_space<vmem>>, vector<1x128xf32>
    %4 = vector.broadcast %3 : vector<1x128xf32> to vector<8x128xf32>
    %5 = arith.addf %2, %4 : vector<8x128xf32>
    %cst_5 = arith.constant 0.000000e+00 : f32
    %6 = vector.broadcast %cst_5 : f32 to vector<8x128xf32>
    %7 = arith.maximumf %5, %6 : vector<8x128xf32>
    %c0_6 = arith.constant 0 : index
    %c0_7 = arith.constant 0 : index
    %c0_8 = arith.constant 0 : index
    %8 = vector.load %arg4[%c0_6, %c0_7, %c0_8] : memref<5x128x128xf32, #tpu.memory_space<vmem>>, vector<1x128x128xf32>
    %9 = vector.shape_cast %8 : vector<1x128x128xf32> to vector<128x128xf32>
    %cst_9 = arith.constant dense<0.000000e+00> : vector<8x128xf32>
    %10 = tpu.matmul %7, %9, %cst_9 {dimension_numbers = #tpu.dot_dimension_numbers<[1], [0], [0], [1], [0, 0, 1, 1], [], []>} : vector<8x128xf32>, vector<128x128xf32>, vector<8x128xf32> -> vector<8x128xf32>
    %c1 = arith.constant 1 : index
    %c0_10 = arith.constant 0 : index
    %11 = vector.load %arg5[%c1, %c0_10] : memref<6x128xf32, #tpu.memory_space<vmem>>, vector<1x128xf32>
    %12 = vector.broadcast %11 : vector<1x128xf32> to vector<8x128xf32>
    %13 = arith.addf %10, %12 : vector<8x128xf32>
    %cst_11 = arith.constant 0.000000e+00 : f32
    %14 = vector.broadcast %cst_11 : f32 to vector<8x128xf32>
    %15 = arith.maximumf %13, %14 : vector<8x128xf32>
    %c1_12 = arith.constant 1 : index
    %c0_13 = arith.constant 0 : index
    %c0_14 = arith.constant 0 : index
    %16 = vector.load %arg4[%c1_12, %c0_13, %c0_14] : memref<5x128x128xf32, #tpu.memory_space<vmem>>, vector<1x128x128xf32>
    %17 = vector.shape_cast %16 : vector<1x128x128xf32> to vector<128x128xf32>
    %cst_15 = arith.constant dense<0.000000e+00> : vector<8x128xf32>
    %18 = tpu.matmul %15, %17, %cst_15 {dimension_numbers = #tpu.dot_dimension_numbers<[1], [0], [0], [1], [0, 0, 1, 1], [], []>} : vector<8x128xf32>, vector<128x128xf32>, vector<8x128xf32> -> vector<8x128xf32>
    %c2 = arith.constant 2 : index
    %c0_16 = arith.constant 0 : index
    %19 = vector.load %arg5[%c2, %c0_16] : memref<6x128xf32, #tpu.memory_space<vmem>>, vector<1x128xf32>
    %20 = vector.broadcast %19 : vector<1x128xf32> to vector<8x128xf32>
    %21 = arith.addf %18, %20 : vector<8x128xf32>
    %c0_17 = arith.constant 0 : index
    %c0_18 = arith.constant 0 : index
    %22 = vector.load %arg6[%c0_17, %c0_18] : memref<8x128xf32, #tpu.memory_space<vmem>>, vector<8x128xf32>
    tpu.vector_store %arg6[%c0_17, %c0_18], %21 {strides = array<i32>} : memref<8x128xf32, #tpu.memory_space<vmem>>, vector<8x128xf32>,
    %23 = tpu.iota {dimensions = array<i32: 1>} : vector<8x128xi32>
    %c8_i32 = arith.constant 8 : i32
    %24 = vector.broadcast %c8_i32 : i32 to vector<8x128xi32>
    %25 = arith.cmpi slt, %23, %24 : vector<8x128xi32>
    %26 = math.exp %21 : vector<8x128xf32>
    %c0_19 = arith.constant 0 : index
    %c0_20 = arith.constant 0 : index
    %27 = vector.load %arg2[%c0_19, %c0_20] : memref<8x128xf32, #tpu.memory_space<vmem>>, vector<8x128xf32>
    %28 = arith.mulf %26, %27 : vector<8x128xf32>
    %29 = arith.select %25, %21, %28 : vector<8x128xi1>, vector<8x128xf32>
    %c2_21 = arith.constant 2 : index
    %c0_22 = arith.constant 0 : index
    %c0_23 = arith.constant 0 : index
    %30 = vector.load %arg4[%c2_21, %c0_22, %c0_23] : memref<5x128x128xf32, #tpu.memory_space<vmem>>, vector<1x128x128xf32>
    %31 = vector.shape_cast %30 : vector<1x128x128xf32> to vector<128x128xf32>
    %cst_24 = arith.constant dense<0.000000e+00> : vector<8x128xf32>
    %32 = tpu.matmul %29, %31, %cst_24 {dimension_numbers = #tpu.dot_dimension_numbers<[1], [0], [0], [1], [0, 0, 1, 1], [], []>} : vector<8x128xf32>, vector<128x128xf32>, vector<8x128xf32> -> vector<8x128xf32>
    %c3 = arith.constant 3 : index
    %c0_25 = arith.constant 0 : index
    %33 = vector.load %arg5[%c3, %c0_25] : memref<6x128xf32, #tpu.memory_space<vmem>>, vector<1x128xf32>
    %34 = vector.broadcast %33 : vector<1x128xf32> to vector<8x128xf32>
    %35 = arith.addf %32, %34 : vector<8x128xf32>
    %cst_26 = arith.constant 0.000000e+00 : f32
    %36 = vector.broadcast %cst_26 : f32 to vector<8x128xf32>
    %37 = arith.maximumf %35, %36 : vector<8x128xf32>
    %c3_27 = arith.constant 3 : index
    %c0_28 = arith.constant 0 : index
    %c0_29 = arith.constant 0 : index
    %38 = vector.load %arg4[%c3_27, %c0_28, %c0_29] : memref<5x128x128xf32, #tpu.memory_space<vmem>>, vector<1x128x128xf32>
    %39 = vector.shape_cast %38 : vector<1x128x128xf32> to vector<128x128xf32>
    %cst_30 = arith.constant dense<0.000000e+00> : vector<8x128xf32>
    %40 = tpu.matmul %37, %39, %cst_30 {dimension_numbers = #tpu.dot_dimension_numbers<[1], [0], [0], [1], [0, 0, 1, 1], [], []>} : vector<8x128xf32>, vector<128x128xf32>, vector<8x128xf32> -> vector<8x128xf32>
    %c4 = arith.constant 4 : index
    %c0_31 = arith.constant 0 : index
    %41 = vector.load %arg5[%c4, %c0_31] : memref<6x128xf32, #tpu.memory_space<vmem>>, vector<1x128xf32>
    %42 = vector.broadcast %41 : vector<1x128xf32> to vector<8x128xf32>
    %43 = arith.addf %40, %42 : vector<8x128xf32>
    %cst_32 = arith.constant 0.000000e+00 : f32
    %44 = vector.broadcast %cst_32 : f32 to vector<8x128xf32>
    %45 = arith.maximumf %43, %44 : vector<8x128xf32>
    %c4_33 = arith.constant 4 : index
    %c0_34 = arith.constant 0 : index
    %c0_35 = arith.constant 0 : index
    %46 = vector.load %arg4[%c4_33, %c0_34, %c0_35] : memref<5x128x128xf32, #tpu.memory_space<vmem>>, vector<1x128x128xf32>
    %47 = vector.shape_cast %46 : vector<1x128x128xf32> to vector<128x128xf32>
    %cst_36 = arith.constant dense<0.000000e+00> : vector<8x128xf32>
    %48 = tpu.matmul %45, %47, %cst_36 {dimension_numbers = #tpu.dot_dimension_numbers<[1], [0], [0], [1], [0, 0, 1, 1], [], []>} : vector<8x128xf32>, vector<128x128xf32>, vector<8x128xf32> -> vector<8x128xf32>
    %c5 = arith.constant 5 : index
    %c0_37 = arith.constant 0 : index
    %49 = vector.load %arg5[%c5, %c0_37] : memref<6x128xf32, #tpu.memory_space<vmem>>, vector<1x128xf32>
    %50 = vector.broadcast %49 : vector<1x128xf32> to vector<8x128xf32>
    %51 = arith.addf %48, %50 : vector<8x128xf32>
    %c0_38 = arith.constant 0 : index
    %c0_39 = arith.constant 0 : index
    %52 = vector.load %arg7[%c0_38, %c0_39] : memref<8x128xf32, #tpu.memory_space<vmem>>, vector<8x128xf32>
    tpu.vector_store %arg7[%c0_38, %c0_39], %51 {strides = array<i32>} : memref<8x128xf32, #tpu.memory_space<vmem>>, vector<8x128xf32>,
    return
  }
  func.func @transform_0(%arg0: i32) -> (i32, i32) {
    %c0_i32 = arith.constant 0 : i32
    %c0_i32_0 = arith.constant 0 : i32
    return %arg0, %c0_i32 : i32, i32
  }
  func.func @transform_1(%arg0: i32) -> (i32, i32) {
    %c0_i32 = arith.constant 0 : i32
    %c0_i32_0 = arith.constant 0 : i32
    return %arg0, %c0_i32 : i32, i32
  }
  func.func @transform_2(%arg0: i32) -> (i32, i32) {
    %c0_i32 = arith.constant 0 : i32
    %c0_i32_0 = arith.constant 0 : i32
    %c0_i32_1 = arith.constant 0 : i32
    return %c0_i32, %c0_i32_0 : i32, i32
  }
  func.func @transform_3(%arg0: i32) -> (i32, i32, i32) {
    %c0_i32 = arith.constant 0 : i32
    %c0_i32_0 = arith.constant 0 : i32
    %c0_i32_1 = arith.constant 0 : i32
    %c0_i32_2 = arith.constant 0 : i32
    return %c0_i32, %c0_i32_0, %c0_i32_1 : i32, i32, i32
  }
  func.func @transform_4(%arg0: i32) -> (i32, i32) {
    %c0_i32 = arith.constant 0 : i32
    %c0_i32_0 = arith.constant 0 : i32
    %c0_i32_1 = arith.constant 0 : i32
    return %c0_i32, %c0_i32_0 : i32, i32
  }
  func.func @transform_5(%arg0: i32) -> (i32, i32) {
    %c0_i32 = arith.constant 0 : i32
    %c0_i32_0 = arith.constant 0 : i32
    return %arg0, %c0_i32 : i32, i32
  }
  func.func @transform_6(%arg0: i32) -> (i32, i32) {
    %c0_i32 = arith.constant 0 : i32
    %c0_i32_0 = arith.constant 0 : i32
    return %arg0, %c0_i32 : i32, i32
  }
}

</mosaic_0001>

<llo_original>
// kernel: tpu_custom_call.1
$region0: #{tpu_custom_call.1}
  #allocation0 [shape = 'u32[]', space=smem, size = 0x4, offset = 0x4, fixed_abs, tag = 'smem constant byte address 0x4 - core index']
  #allocation1 [shape = 'u32[144,128]{1,0:T(1,128)}', space=vmem, size = 0x12000, scoped, tag = 'internal scratch']
  %s0 = inlined_call_operand.hbm [shape: f32[8,24], index: 0, kind: input, shape index: {}]
  %s1 = inlined_call_operand.hbm [shape: f32[8,128], index: 1, kind: input, shape index: {}]
  %s2 = inlined_call_operand.hbm [shape: f32[24,128], index: 2, kind: input, shape index: {}]
  %s3 = inlined_call_operand.hbm [shape: f32[5,128,128], index: 3, kind: input, shape index: {}]
  %s4 = inlined_call_operand.vmem [shape: f32[6,128], index: 4, kind: input, shape index: {}]
  %s5 = inlined_call_operand.hbm [shape: f32[8,128], index: 5, kind: output, shape index: {0}]
  %s6 = inlined_call_operand.hbm [shape: f32[8,128], index: 6, kind: output, shape index: {1}]
  %7 = xla_tuple %s5, %s6
  %s8 = sld [smem:[#allocation0]]
  $region54: #{tpu_custom_call.1} parent=0
    _
  %s10 = ssub.s32 1, %s8
  %s11 = scalar_select 0, %s10, %s8
  $region1: #{tpu_custom_call.1} parent=0
    #allocation2 [shape = 'u8[4096]{0}', space=vmem, size = 0x1000, scoped, tag = 'input window, operand 0, single buffered']
    #allocation3 [shape = 's32[1]{0}', space=sflag, size = 0x4, scoped, tag = 'scoped memory for tpu_custom_call.1']
    #allocation4 [shape = 's32[1]{0}', space=sflag, size = 0x4, scoped, tag = 'scoped memory for tpu_custom_call.1']
    #allocation5 [shape = 'u8[4096]{0}', space=vmem, size = 0x1000, scoped, tag = 'input window, operand 1, single buffered']
    #allocation6 [shape = 's32[1]{0}', space=sflag, size = 0x4, scoped, tag = 'scoped memory for tpu_custom_call.1']
    #allocation7 [shape = 'u8[12288]{0}', space=vmem, size = 0x3000, scoped, tag = 'input window, operand 2, single buffered']
    #allocation8 [shape = 'u8[327680]{0}', space=vmem, size = 0x50000, scoped, tag = 'input window, operand 3, single buffered']
    #allocation9 [shape = 's32[1]{0}', space=sflag, size = 0x4, scoped, tag = 'scoped memory for tpu_custom_call.1']
    #allocation10 [shape = 'u8[4096]{0}', space=vmem, size = 0x1000, scoped, tag = 'output window, operand 0, single buffered']
    #allocation11 [shape = 'u8[4096]{0}', space=vmem, size = 0x1000, scoped, tag = 'output window, operand 1, single buffered']
    #allocation12 [shape = 's32[1]{0}', space=sflag, size = 0x4, scoped, tag = 'scoped memory for tpu_custom_call.1']
    %12 = vsyncpa [#allocation3], 0
    %13 = vsyncpa [#allocation6], 0
    %14 = vsyncpa [#allocation9], 0
    %15 = vsyncpa [#allocation4], 0
    %16 = vsyncpa [#allocation12], 0
    // Predicated region
    $region2: #{tpu_custom_call.1} parent=1 // pred_check
      _
    $region3: #{tpu_custom_call.1} parent=1 // pred_check_branch
      %18 = sbr.rel (0) target = $region5
    $region4: #{tpu_custom_call.1} parent=1 // pred_region
      %s20 = ssub.s32 128, 128
      %21 = vsyncadd [#allocation3], %s20
      %s23 = sshll.u32 [#allocation2], 4
      %s24 = int_to_ptr.vmem [resolvable:$true] %s23
      %26 = dma.hbm_to_vmem [thread:$0]  %s0, 128, %s24, [#allocation3]
    $region5: #{tpu_custom_call.1} parent=1 // pred_fallthru
      _
    // Predicated region
    $region6: #{tpu_custom_call.1} parent=1 // pred_check
      _
    $region7: #{tpu_custom_call.1} parent=1 // pred_check_branch
      %28 = sbr.rel (0) target = $region9
    $region8: #{tpu_custom_call.1} parent=1 // pred_region
      %s30 = ssub.s32 128, 128
      %31 = vsyncadd [#allocation6], %s30
      %s33 = sshll.u32 [#allocation5], 4
      %s34 = int_to_ptr.vmem [resolvable:$true] %s33
      %36 = dma.hbm_to_vmem [thread:$0]  %s1, 128, %s34, [#allocation6]
    $region9: #{tpu_custom_call.1} parent=1 // pred_fallthru
      _
    // Predicated region
    $region10: #{tpu_custom_call.1} parent=1 // pred_check
      _
    $region11: #{tpu_custom_call.1} parent=1 // pred_check_branch
      %38 = sbr.rel (0) target = $region13
    $region12: #{tpu_custom_call.1} parent=1 // pred_region
      %s40 = ssub.s32 384, 384
      %41 = vsyncadd [#allocation6], %s40
      %s42 = sshll.u32 [#allocation7], 4
      %s43 = int_to_ptr.vmem [resolvable:$true] %s42
      %48 = dma.hbm_to_vmem [thread:$0]  %s2, 384, %s43, [#allocation6], 128, 128, 8
    $region13: #{tpu_custom_call.1} parent=1 // pred_fallthru
      _
    // Predicated region
    $region14: #{tpu_custom_call.1} parent=1 // pred_check
      _
    $region15: #{tpu_custom_call.1} parent=1 // pred_check_branch
      %50 = sbr.rel (0) target = $region17
    $region16: #{tpu_custom_call.1} parent=1 // pred_region
      %s52 = ssub.s32 10240, 10240
      %53 = vsyncadd [#allocation9], %s52
      %s54 = sshll.u32 [#allocation8], 4
      %s55 = int_to_ptr.vmem [resolvable:$true] %s54
      %60 = dma.hbm_to_vmem [thread:$0]  %s3, 10240, %s55, [#allocation9], 128, 128, 8
    $region17: #{tpu_custom_call.1} parent=1 // pred_fallthru
      _
    // Predicated region
    $region18: #{tpu_custom_call.1} parent=1 // pred_check
      _
    $region19: #{tpu_custom_call.1} parent=1 // pred_check_branch
      %62 = sbr.rel (0) target = $region21
    $region20: #{tpu_custom_call.1} parent=1 // pred_region
      _
    $region21: #{tpu_custom_call.1} parent=1 // pred_fallthru
      _
    // Predicated region
    $region22: #{tpu_custom_call.1} parent=1 // pred_check
      _
    $region23: #{tpu_custom_call.1} parent=1 // pred_check_branch
      %64 = sbr.rel (0) target = $region25
    $region24: #{tpu_custom_call.1} parent=1 // pred_region
      %65 = dma.done [#allocation3], 128
    $region25: #{tpu_custom_call.1} parent=1 // pred_fallthru
      _
    // Predicated region
    $region26: #{tpu_custom_call.1} parent=1 // pred_check
      _
    $region27: #{tpu_custom_call.1} parent=1 // pred_check_branch
      %67 = sbr.rel (0) target = $region29
    $region28: #{tpu_custom_call.1} parent=1 // pred_region
      %68 = dma.done [#allocation6], 128
    $region29: #{tpu_custom_call.1} parent=1 // pred_fallthru
      _
    // Predicated region
    $region30: #{tpu_custom_call.1} parent=1 // pred_check
      _
    $region31: #{tpu_custom_call.1} parent=1 // pred_check_branch
      %70 = sbr.rel (0) target = $region33
    $region32: #{tpu_custom_call.1} parent=1 // pred_region
      %71 = dma.done [#allocation6], 384
    $region33: #{tpu_custom_call.1} parent=1 // pred_fallthru
      _
    // Predicated region
    $region34: #{tpu_custom_call.1} parent=1 // pred_check
      _
    $region35: #{tpu_custom_call.1} parent=1 // pred_check_branch
      %73 = sbr.rel (0) target = $region37
    $region36: #{tpu_custom_call.1} parent=1 // pred_region
      %74 = dma.done [#allocation9], 10240
    $region37: #{tpu_custom_call.1} parent=1 // pred_fallthru
      _
    %v75 = vld [vmem:[#allocation2] sm:$0xff]
    %v76 = vld [vmem:[#allocation7] sm:$0xff]
    %v77 = vld [vmem:[#allocation7 + $0x8] sm:$0xff]
    %v78 = vld [vmem:[#allocation7 + $0x10] sm:$0xff]
    %v79 = vld [vmem:[%s4] sm:$0x1]
    %v80 = vlaneseq
    %v81 = vshrl.u32 %v80, 7
    %v82 = vsub.s32 0, %v81
    %v83 = vrot.slane %v79, %v82
    %vm84 = vcmask 195584
    %v86 = vsel %vm84, %v75, 0
    %88 = vmatprep.subr.mxu0 0.0
    %89 = vmatpush1.msra.mxu0 %v76
    %90 = vmatprep.subr.mxu0 0.0
    %91 = vmatpush1.msra.mxu0 %v77
    %92 = vmatprep.subr.mxu0 0.0
    %93 = vmatpush1.msra.mxu0 %v78
    %94 = vmatprep.subr.mxu0 0.0
    %95 = vmatpush1.msra.mxu0 0.0
    %96 = vmatprep.subr.mxu0 0.0
    %97 = vmatpush1.msra.mxu0 0.0
    %98 = vmatprep.subr.mxu0 0.0
    %99 = vmatpush1.msra.mxu0 0.0
    %100 = vmatprep.subr.mxu0 0.0
    %101 = vmatpush1.msra.mxu0 0.0
    %102 = vmatprep.subr.mxu0 0.0
    %103 = vmatpush1.msra.mxu0 0.0
    %104 = vmatprep.subr.mxu0 0.0
    %105 = vmatpush1.msra.mxu0 0.0
    %106 = vmatprep.subr.mxu0 0.0
    %107 = vmatpush1.msra.mxu0 0.0
    %108 = vmatprep.subr.mxu0 0.0
    %109 = vmatpush1.msra.mxu0 0.0
    %110 = vmatprep.subr.mxu0 0.0
    %111 = vmatpush1.msra.mxu0 0.0
    %112 = vmatprep.subr.mxu0 0.0
    %113 = vmatpush1.msra.mxu0 0.0
    %114 = vmatprep.subr.mxu0 0.0
    %115 = vmatpush1.msra.mxu0 0.0
    %116 = vmatprep.subr.mxu0 0.0
    %117 = vmatpush1.msra.mxu0 0.0
    %118 = vmatprep.subr.mxu0 0.0
    %119 = vmatpush1.msra.mxu0 0.0
    %120 = vmatprep.subr.mxu0 0.0
    %121 = vmatpush1.msra.mxu0 0.0
    %122 = vmatprep.subr.mxu0 0.0
    %123 = vmatpush1.msra.mxu0 0.0
    %124 = vmatprep.subr.mxu0 0.0
    %125 = vmatpush1.msra.mxu0 0.0
    %126 = vmatprep.subr.mxu0 0.0
    %127 = vmatpush1.msra.mxu0 0.0
    %128 = vmatprep.subr.mxu0 0.0
    %129 = vmatpush1.msra.mxu0 0.0
    %130 = vmatprep.subr.mxu0 0.0
    %131 = vmatpush1.msra.mxu0 0.0
    %132 = vmatprep.subr.mxu0 0.0
    %133 = vmatpush1.msra.mxu0 0.0
    %134 = vmatprep.subr.mxu0 0.0
    %135 = vmatpush1.msra.mxu0 0.0
    %136 = vmatprep.subr.mxu0 0.0
    %137 = vmatpush1.msra.mxu0 0.0
    %138 = vmatprep.subr.mxu0 0.0
    %139 = vmatpush1.msra.mxu0 0.0
    %140 = vmatprep.subr.mxu0 0.0
    %141 = vmatpush1.msra.mxu0 0.0
    %142 = vmatprep.subr.mxu0 0.0
    %143 = vmatpush1.msra.mxu0 0.0
    %144 = vmatprep.subr.mxu0 0.0
    %145 = vmatpush1.msra.mxu0 0.0
    %146 = vmatprep.subr.mxu0 0.0
    %147 = vmatpush1.msra.mxu0 0.0
    %148 = vmatprep.subr.mxu0 0.0
    %149 = vmatpush1.msra.mxu0 0.0
    %150 = vmatprep.subr.mxu0 0.0
    %151 = vmatpush1.msra.mxu0 0.0
    %152 = vmatprep.mubr.f32.mxu0 0.0
    %153 = vmatmul.mubr.f32.gmra.mrb[0].mxu0 %v86
    %v154 = vpop.f32.mrb[0].mxu0
    %v155 = vadd.f32 %v83, %v154
    %v156 = vpop.f32.mrb[0].mxu0
    %157 = vdwg.mxu0
    %v158 = vmax.f32 %v155, 0.0
    %v159 = vld [vmem:[#allocation8] sm:$0xff]
    %v160 = vld [vmem:[#allocation8 + $0x8] sm:$0xff]
    %v161 = vld [vmem:[#allocation8 + $0x10] sm:$0xff]
    %v162 = vld [vmem:[#allocation8 + $0x18] sm:$0xff]
    %v163 = vld [vmem:[#allocation8 + $0x20] sm:$0xff]
    %v164 = vld [vmem:[#allocation8 + $0x28] sm:$0xff]
    %v165 = vld [vmem:[#allocation8 + $0x30] sm:$0xff]
    %v166 = vld [vmem:[#allocation8 + $0x38] sm:$0xff]
    %v167 = vld [vmem:[#allocation8 + $0x40] sm:$0xff]
    %v168 = vld [vmem:[#allocation8 + $0x48] sm:$0xff]
    %v169 = vld [vmem:[#allocation8 + $0x50] sm:$0xff]
    %v170 = vld [vmem:[#allocation8 + $0x58] sm:$0xff]
    %v171 = vld [vmem:[#allocation8 + $0x60] sm:$0xff]
    %v172 = vld [vmem:[#allocation8 + $0x68] sm:$0xff]
    %v173 = vld [vmem:[#allocation8 + $0x70] sm:$0xff]
    %v174 = vld [vmem:[#allocation8 + $0x78] sm:$0xff]
    %v175 = vld [vmem:[%s4 + $0x1] sm:$0x1]
    %v176 = vlaneseq
    %v177 = vshrl.u32 %v176, 7
    %v178 = vsub.s32 0, %v177
    %v179 = vrot.slane %v175, %v178
    %180 = vmatprep.subr.mxu0 0.0
    %181 = vmatpush1.msra.mxu0 %v159
    %182 = vmatprep.subr.mxu0 0.0
    %183 = vmatpush1.msra.mxu0 %v160
    %184 = vmatprep.subr.mxu0 0.0
    %185 = vmatpush1.msra.mxu0 %v161
    %186 = vmatprep.subr.mxu0 0.0
    %187 = vmatpush1.msra.mxu0 %v162
    %188 = vmatprep.subr.mxu0 0.0
    %189 = vmatpush1.msra.mxu0 %v163
    %190 = vmatprep.subr.mxu0 0.0
    %191 = vmatpush1.msra.mxu0 %v164
    %192 = vmatprep.subr.mxu0 0.0
    %193 = vmatpush1.msra.mxu0 %v165
    %194 = vmatprep.subr.mxu0 0.0
    %195 = vmatpush1.msra.mxu0 %v166
    %196 = vmatprep.subr.mxu0 0.0
    %197 = vmatpush1.msra.mxu0 %v167
    %198 = vmatprep.subr.mxu0 0.0
    %199 = vmatpush1.msra.mxu0 %v168
    %200 = vmatprep.subr.mxu0 0.0
    %201 = vmatpush1.msra.mxu0 %v169
    %202 = vmatprep.subr.mxu0 0.0
    %203 = vmatpush1.msra.mxu0 %v170
    %204 = vmatprep.subr.mxu0 0.0
    %205 = vmatpush1.msra.mxu0 %v171
    %206 = vmatprep.subr.mxu0 0.0
    %207 = vmatpush1.msra.mxu0 %v172
    %208 = vmatprep.subr.mxu0 0.0
    %209 = vmatpush1.msra.mxu0 %v173
    %210 = vmatprep.subr.mxu0 0.0
    %211 = vmatpush1.msra.mxu0 %v174
    %212 = vmatprep.subr.mxu0 0.0
    %213 = vmatpush1.msra.mxu0 0.0
    %214 = vmatprep.subr.mxu0 0.0
    %215 = vmatpush1.msra.mxu0 0.0
    %216 = vmatprep.subr.mxu0 0.0
    %217 = vmatpush1.msra.mxu0 0.0
    %218 = vmatprep.subr.mxu0 0.0
    %219 = vmatpush1.msra.mxu0 0.0
    %220 = vmatprep.subr.mxu0 0.0
    %221 = vmatpush1.msra.mxu0 0.0
    %222 = vmatprep.subr.mxu0 0.0
    %223 = vmatpush1.msra.mxu0 0.0
    %224 = vmatprep.subr.mxu0 0.0
    %225 = vmatpush1.msra.mxu0 0.0
    %226 = vmatprep.subr.mxu0 0.0
    %227 = vmatpush1.msra.mxu0 0.0
    %228 = vmatprep.subr.mxu0 0.0
    %229 = vmatpush1.msra.mxu0 0.0
    %230 = vmatprep.subr.mxu0 0.0
    %231 = vmatpush1.msra.mxu0 0.0
    %232 = vmatprep.subr.mxu0 0.0
    %233 = vmatpush1.msra.mxu0 0.0
    %234 = vmatprep.subr.mxu0 0.0
    %235 = vmatpush1.msra.mxu0 0.0
    %236 = vmatprep.subr.mxu0 0.0
    %237 = vmatpush1.msra.mxu0 0.0
    %238 = vmatprep.subr.mxu0 0.0
    %239 = vmatpush1.msra.mxu0 0.0
    %240 = vmatprep.subr.mxu0 0.0
    %241 = vmatpush1.msra.mxu0 0.0
    %242 = vmatprep.subr.mxu0 0.0
    %243 = vmatpush1.msra.mxu0 0.0
    %244 = vmatprep.mubr.f32.mxu0 0.0
    %245 = vmatmul.mubr.f32.gmra.mrb[0].mxu0 %v158
    %v246 = vpop.f32.mrb[0].mxu0
    %v247 = vadd.f32 %v179, %v246
    %v248 = vpop.f32.mrb[0].mxu0
    %249 = vdwg.mxu0
    %v250 = vmax.f32 %v247, 0.0
    %s251 = scalar_lea.vmem [#allocation8], 128
    %v252 = vld [vmem:[%s251] sm:$0xff]
    %v253 = vld [vmem:[%s251 + $0x8] sm:$0xff]
    %v254 = vld [vmem:[%s251 + $0x10] sm:$0xff]
    %v255 = vld [vmem:[%s251 + $0x18] sm:$0xff]
    %v256 = vld [vmem:[%s251 + $0x20] sm:$0xff]
    %v257 = vld [vmem:[%s251 + $0x28] sm:$0xff]
    %v258 = vld [vmem:[%s251 + $0x30] sm:$0xff]
    %v259 = vld [vmem:[%s251 + $0x38] sm:$0xff]
    %v260 = vld [vmem:[%s251 + $0x40] sm:$0xff]
    %v261 = vld [vmem:[%s251 + $0x48] sm:$0xff]
    %v262 = vld [vmem:[%s251 + $0x50] sm:$0xff]
    %v263 = vld [vmem:[%s251 + $0x58] sm:$0xff]
    %v264 = vld [vmem:[%s251 + $0x60] sm:$0xff]
    %v265 = vld [vmem:[%s251 + $0x68] sm:$0xff]
    %v266 = vld [vmem:[%s251 + $0x70] sm:$0xff]
    %v267 = vld [vmem:[%s251 + $0x78] sm:$0xff]
    %v268 = vld [vmem:[%s4 + $0x2] sm:$0x1]
    %v269 = vlaneseq
    %v270 = vshrl.u32 %v269, 7
    %v271 = vsub.s32 0, %v270
    %v272 = vrot.slane %v268, %v271
    %273 = vmatprep.subr.mxu0 0.0
    %274 = vmatpush1.msra.mxu0 %v252
    %275 = vmatprep.subr.mxu0 0.0
    %276 = vmatpush1.msra.mxu0 %v253
    %277 = vmatprep.subr.mxu0 0.0
    %278 = vmatpush1.msra.mxu0 %v254
    %279 = vmatprep.subr.mxu0 0.0
    %280 = vmatpush1.msra.mxu0 %v255
    %281 = vmatprep.subr.mxu0 0.0
    %282 = vmatpush1.msra.mxu0 %v256
    %283 = vmatprep.subr.mxu0 0.0
    %284 = vmatpush1.msra.mxu0 %v257
    %285 = vmatprep.subr.mxu0 0.0
    %286 = vmatpush1.msra.mxu0 %v258
    %287 = vmatprep.subr.mxu0 0.0
    %288 = vmatpush1.msra.mxu0 %v259
    %289 = vmatprep.subr.mxu0 0.0
    %290 = vmatpush1.msra.mxu0 %v260
    %291 = vmatprep.subr.mxu0 0.0
    %292 = vmatpush1.msra.mxu0 %v261
    %293 = vmatprep.subr.mxu0 0.0
    %294 = vmatpush1.msra.mxu0 %v262
    %295 = vmatprep.subr.mxu0 0.0
    %296 = vmatpush1.msra.mxu0 %v263
    %297 = vmatprep.subr.mxu0 0.0
    %298 = vmatpush1.msra.mxu0 %v264
    %299 = vmatprep.subr.mxu0 0.0
    %300 = vmatpush1.msra.mxu0 %v265
    %301 = vmatprep.subr.mxu0 0.0
    %302 = vmatpush1.msra.mxu0 %v266
    %303 = vmatprep.subr.mxu0 0.0
    %304 = vmatpush1.msra.mxu0 %v267
    %305 = vmatprep.subr.mxu0 0.0
    %306 = vmatpush1.msra.mxu0 0.0
    %307 = vmatprep.subr.mxu0 0.0
    %308 = vmatpush1.msra.mxu0 0.0
    %309 = vmatprep.subr.mxu0 0.0
    %310 = vmatpush1.msra.mxu0 0.0
    %311 = vmatprep.subr.mxu0 0.0
    %312 = vmatpush1.msra.mxu0 0.0
    %313 = vmatprep.subr.mxu0 0.0
    %314 = vmatpush1.msra.mxu0 0.0
    %315 = vmatprep.subr.mxu0 0.0
    %316 = vmatpush1.msra.mxu0 0.0
    %317 = vmatprep.subr.mxu0 0.0
    %318 = vmatpush1.msra.mxu0 0.0
    %319 = vmatprep.subr.mxu0 0.0
    %320 = vmatpush1.msra.mxu0 0.0
    %321 = vmatprep.subr.mxu0 0.0
    %322 = vmatpush1.msra.mxu0 0.0
    %323 = vmatprep.subr.mxu0 0.0
    %324 = vmatpush1.msra.mxu0 0.0
    %325 = vmatprep.subr.mxu0 0.0
    %326 = vmatpush1.msra.mxu0 0.0
    %327 = vmatprep.subr.mxu0 0.0
    %328 = vmatpush1.msra.mxu0 0.0
    %329 = vmatprep.subr.mxu0 0.0
    %330 = vmatpush1.msra.mxu0 0.0
    %331 = vmatprep.subr.mxu0 0.0
    %332 = vmatpush1.msra.mxu0 0.0
    %333 = vmatprep.subr.mxu0 0.0
    %334 = vmatpush1.msra.mxu0 0.0
    %335 = vmatprep.subr.mxu0 0.0
    %336 = vmatpush1.msra.mxu0 0.0
    %337 = vmatprep.mubr.f32.mxu0 0.0
    %338 = vmatmul.mubr.f32.gmra.mrb[0].mxu0 %v250
    %v339 = vpop.f32.mrb[0].mxu0
    %v340 = vadd.f32 %v272, %v339
    %v341 = vpop.f32.mrb[0].mxu0
    %342 = vdwg.mxu0
    %343 = vst [vmem:[#allocation10] sm:$0xff] %v340
    %v344 = vlaneseq
    %v345 = vand.u32 %v344, 127
    %vm346 = vcmp.lt.s32.totalorder %v345, 8
    %v347 = vmul.f32 %v340, 1.442695
    %v348 = vpow.pop %v347
    %v349 = vld [vmem:[#allocation5] sm:$0xff]
    %v350 = vmul.f32 %v348, %v349
    %v351 = vsel %vm346, %v340, %v350
    %s352 = scalar_lea.vmem [#allocation8], 256
    %v353 = vld [vmem:[%s352] sm:$0xff]
    %v354 = vld [vmem:[%s352 + $0x8] sm:$0xff]
    %v355 = vld [vmem:[%s352 + $0x10] sm:$0xff]
    %v356 = vld [vmem:[%s352 + $0x18] sm:$0xff]
    %v357 = vld [vmem:[%s352 + $0x20] sm:$0xff]
    %v358 = vld [vmem:[%s352 + $0x28] sm:$0xff]
    %v359 = vld [vmem:[%s352 + $0x30] sm:$0xff]
    %v360 = vld [vmem:[%s352 + $0x38] sm:$0xff]
    %v361 = vld [vmem:[%s352 + $0x40] sm:$0xff]
    %v362 = vld [vmem:[%s352 + $0x48] sm:$0xff]
    %v363 = vld [vmem:[%s352 + $0x50] sm:$0xff]
    %v364 = vld [vmem:[%s352 + $0x58] sm:$0xff]
    %v365 = vld [vmem:[%s352 + $0x60] sm:$0xff]
    %v366 = vld [vmem:[%s352 + $0x68] sm:$0xff]
    %v367 = vld [vmem:[%s352 + $0x70] sm:$0xff]
    %v368 = vld [vmem:[%s352 + $0x78] sm:$0xff]
    %v369 = vld [vmem:[%s4 + $0x3] sm:$0x1]
    %v370 = vlaneseq
    %v371 = vshrl.u32 %v370, 7
    %v372 = vsub.s32 0, %v371
    %v373 = vrot.slane %v369, %v372
    %374 = vmatprep.subr.mxu0 0.0
    %375 = vmatpush1.msra.mxu0 %v353
    %376 = vmatprep.subr.mxu0 0.0
    %377 = vmatpush1.msra.mxu0 %v354
    %378 = vmatprep.subr.mxu0 0.0
    %379 = vmatpush1.msra.mxu0 %v355
    %380 = vmatprep.subr.mxu0 0.0
    %381 = vmatpush1.msra.mxu0 %v356
    %382 = vmatprep.subr.mxu0 0.0
    %383 = vmatpush1.msra.mxu0 %v357
    %384 = vmatprep.subr.mxu0 0.0
    %385 = vmatpush1.msra.mxu0 %v358
    %386 = vmatprep.subr.mxu0 0.0
    %387 = vmatpush1.msra.mxu0 %v359
    %388 = vmatprep.subr.mxu0 0.0
    %389 = vmatpush1.msra.mxu0 %v360
    %390 = vmatprep.subr.mxu0 0.0
    %391 = vmatpush1.msra.mxu0 %v361
    %392 = vmatprep.subr.mxu0 0.0
    %393 = vmatpush1.msra.mxu0 %v362
    %394 = vmatprep.subr.mxu0 0.0
    %395 = vmatpush1.msra.mxu0 %v363
    %396 = vmatprep.subr.mxu0 0.0
    %397 = vmatpush1.msra.mxu0 %v364
    %398 = vmatprep.subr.mxu0 0.0
    %399 = vmatpush1.msra.mxu0 %v365
    %400 = vmatprep.subr.mxu0 0.0
    %401 = vmatpush1.msra.mxu0 %v366
    %402 = vmatprep.subr.mxu0 0.0
    %403 = vmatpush1.msra.mxu0 %v367
    %404 = vmatprep.subr.mxu0 0.0
    %405 = vmatpush1.msra.mxu0 %v368
    %406 = vmatprep.subr.mxu0 0.0
    %407 = vmatpush1.msra.mxu0 0.0
    %408 = vmatprep.subr.mxu0 0.0
    %409 = vmatpush1.msra.mxu0 0.0
    %410 = vmatprep.subr.mxu0 0.0
    %411 = vmatpush1.msra.mxu0 0.0
    %412 = vmatprep.subr.mxu0 0.0
    %413 = vmatpush1.msra.mxu0 0.0
    %414 = vmatprep.subr.mxu0 0.0
    %415 = vmatpush1.msra.mxu0 0.0
    %416 = vmatprep.subr.mxu0 0.0
    %417 = vmatpush1.msra.mxu0 0.0
    %418 = vmatprep.subr.mxu0 0.0
    %419 = vmatpush1.msra.mxu0 0.0
    %420 = vmatprep.subr.mxu0 0.0
    %421 = vmatpush1.msra.mxu0 0.0
    %422 = vmatprep.subr.mxu0 0.0
    %423 = vmatpush1.msra.mxu0 0.0
    %424 = vmatprep.subr.mxu0 0.0
    %425 = vmatpush1.msra.mxu0 0.0
    %426 = vmatprep.subr.mxu0 0.0
    %427 = vmatpush1.msra.mxu0 0.0
    %428 = vmatprep.subr.mxu0 0.0
    %429 = vmatpush1.msra.mxu0 0.0
    %430 = vmatprep.subr.mxu0 0.0
    %431 = vmatpush1.msra.mxu0 0.0
    %432 = vmatprep.subr.mxu0 0.0
    %433 = vmatpush1.msra.mxu0 0.0
    %434 = vmatprep.subr.mxu0 0.0
    %435 = vmatpush1.msra.mxu0 0.0
    %436 = vmatprep.subr.mxu0 0.0
    %437 = vmatpush1.msra.mxu0 0.0
    %438 = vmatprep.mubr.f32.mxu0 0.0
    %439 = vmatmul.mubr.f32.gmra.mrb[0].mxu0 %v351
    %v440 = vpop.f32.mrb[0].mxu0
    %v441 = vadd.f32 %v373, %v440
    %v442 = vpop.f32.mrb[0].mxu0
    %443 = vdwg.mxu0
    %v444 = vmax.f32 %v441, 0.0
    %s445 = scalar_lea.vmem [#allocation8], 384
    %v446 = vld [vmem:[%s445] sm:$0xff]
    %v447 = vld [vmem:[%s445 + $0x8] sm:$0xff]
    %v448 = vld [vmem:[%s445 + $0x10] sm:$0xff]
    %v449 = vld [vmem:[%s445 + $0x18] sm:$0xff]
    %v450 = vld [vmem:[%s445 + $0x20] sm:$0xff]
    %v451 = vld [vmem:[%s445 + $0x28] sm:$0xff]
    %v452 = vld [vmem:[%s445 + $0x30] sm:$0xff]
    %v453 = vld [vmem:[%s445 + $0x38] sm:$0xff]
    %v454 = vld [vmem:[%s445 + $0x40] sm:$0xff]
    %v455 = vld [vmem:[%s445 + $0x48] sm:$0xff]
    %v456 = vld [vmem:[%s445 + $0x50] sm:$0xff]
    %v457 = vld [vmem:[%s445 + $0x58] sm:$0xff]
    %v458 = vld [vmem:[%s445 + $0x60] sm:$0xff]
    %v459 = vld [vmem:[%s445 + $0x68] sm:$0xff]
    %v460 = vld [vmem:[%s445 + $0x70] sm:$0xff]
    %v461 = vld [vmem:[%s445 + $0x78] sm:$0xff]
    %v462 = vld [vmem:[%s4 + $0x4] sm:$0x1]
    %v463 = vlaneseq
    %v464 = vshrl.u32 %v463, 7
    %v465 = vsub.s32 0, %v464
    %v466 = vrot.slane %v462, %v465
    %467 = vmatprep.subr.mxu0 0.0
    %468 = vmatpush1.msra.mxu0 %v446
    %469 = vmatprep.subr.mxu0 0.0
    %470 = vmatpush1.msra.mxu0 %v447
    %471 = vmatprep.subr.mxu0 0.0
    %472 = vmatpush1.msra.mxu0 %v448
    %473 = vmatprep.subr.mxu0 0.0
    %474 = vmatpush1.msra.mxu0 %v449
    %475 = vmatprep.subr.mxu0 0.0
    %476 = vmatpush1.msra.mxu0 %v450
    %477 = vmatprep.subr.mxu0 0.0
    %478 = vmatpush1.msra.mxu0 %v451
    %479 = vmatprep.subr.mxu0 0.0
    %480 = vmatpush1.msra.mxu0 %v452
    %481 = vmatprep.subr.mxu0 0.0
    %482 = vmatpush1.msra.mxu0 %v453
    %483 = vmatprep.subr.mxu0 0.0
    %484 = vmatpush1.msra.mxu0 %v454
    %485 = vmatprep.subr.mxu0 0.0
    %486 = vmatpush1.msra.mxu0 %v455
    %487 = vmatprep.subr.mxu0 0.0
    %488 = vmatpush1.msra.mxu0 %v456
    %489 = vmatprep.subr.mxu0 0.0
    %490 = vmatpush1.msra.mxu0 %v457
    %491 = vmatprep.subr.mxu0 0.0
    %492 = vmatpush1.msra.mxu0 %v458
    %493 = vmatprep.subr.mxu0 0.0
    %494 = vmatpush1.msra.mxu0 %v459
    %495 = vmatprep.subr.mxu0 0.0
    %496 = vmatpush1.msra.mxu0 %v460
    %497 = vmatprep.subr.mxu0 0.0
    %498 = vmatpush1.msra.mxu0 %v461
    %499 = vmatprep.subr.mxu0 0.0
    %500 = vmatpush1.msra.mxu0 0.0
    %501 = vmatprep.subr.mxu0 0.0
    %502 = vmatpush1.msra.mxu0 0.0
    %503 = vmatprep.subr.mxu0 0.0
    %504 = vmatpush1.msra.mxu0 0.0
    %505 = vmatprep.subr.mxu0 0.0
    %506 = vmatpush1.msra.mxu0 0.0
    %507 = vmatprep.subr.mxu0 0.0
    %508 = vmatpush1.msra.mxu0 0.0
    %509 = vmatprep.subr.mxu0 0.0
    %510 = vmatpush1.msra.mxu0 0.0
    %511 = vmatprep.subr.mxu0 0.0
    %512 = vmatpush1.msra.mxu0 0.0
    %513 = vmatprep.subr.mxu0 0.0
    %514 = vmatpush1.msra.mxu0 0.0
    %515 = vmatprep.subr.mxu0 0.0
    %516 = vmatpush1.msra.mxu0 0.0
    %517 = vmatprep.subr.mxu0 0.0
    %518 = vmatpush1.msra.mxu0 0.0
    %519 = vmatprep.subr.mxu0 0.0
    %520 = vmatpush1.msra.mxu0 0.0
    %521 = vmatprep.subr.mxu0 0.0
    %522 = vmatpush1.msra.mxu0 0.0
    %523 = vmatprep.subr.mxu0 0.0
    %524 = vmatpush1.msra.mxu0 0.0
    %525 = vmatprep.subr.mxu0 0.0
    %526 = vmatpush1.msra.mxu0 0.0
    %527 = vmatprep.subr.mxu0 0.0
    %528 = vmatpush1.msra.mxu0 0.0
    %529 = vmatprep.subr.mxu0 0.0
    %530 = vmatpush1.msra.mxu0 0.0
    %531 = vmatprep.mubr.f32.mxu0 0.0
    %532 = vmatmul.mubr.f32.gmra.mrb[0].mxu0 %v444
    %v533 = vpop.f32.mrb[0].mxu0
    %v534 = vadd.f32 %v466, %v533
    %v535 = vpop.f32.mrb[0].mxu0
    %536 = vdwg.mxu0
    %v537 = vmax.f32 %v534, 0.0
    %s538 = scalar_lea.vmem [#allocation8], 512
    %v539 = vld [vmem:[%s538] sm:$0xff]
    %v540 = vld [vmem:[%s538 + $0x8] sm:$0xff]
    %v541 = vld [vmem:[%s538 + $0x10] sm:$0xff]
    %v542 = vld [vmem:[%s538 + $0x18] sm:$0xff]
    %v543 = vld [vmem:[%s538 + $0x20] sm:$0xff]
    %v544 = vld [vmem:[%s538 + $0x28] sm:$0xff]
    %v545 = vld [vmem:[%s538 + $0x30] sm:$0xff]
    %v546 = vld [vmem:[%s538 + $0x38] sm:$0xff]
    %v547 = vld [vmem:[%s538 + $0x40] sm:$0xff]
    %v548 = vld [vmem:[%s538 + $0x48] sm:$0xff]
    %v549 = vld [vmem:[%s538 + $0x50] sm:$0xff]
    %v550 = vld [vmem:[%s538 + $0x58] sm:$0xff]
    %v551 = vld [vmem:[%s538 + $0x60] sm:$0xff]
    %v552 = vld [vmem:[%s538 + $0x68] sm:$0xff]
    %v553 = vld [vmem:[%s538 + $0x70] sm:$0xff]
    %v554 = vld [vmem:[%s538 + $0x78] sm:$0xff]
    %v555 = vld [vmem:[%s4 + $0x5] sm:$0x1]
    %v556 = vlaneseq
    %v557 = vshrl.u32 %v556, 7
    %v558 = vsub.s32 0, %v557
    %v559 = vrot.slane %v555, %v558
    %560 = vmatprep.subr.mxu0 0.0
    %561 = vmatpush1.msra.mxu0 %v539
    %562 = vmatprep.subr.mxu0 0.0
    %563 = vmatpush1.msra.mxu0 %v540
    %564 = vmatprep.subr.mxu0 0.0
    %565 = vmatpush1.msra.mxu0 %v541
    %566 = vmatprep.subr.mxu0 0.0
    %567 = vmatpush1.msra.mxu0 %v542
    %568 = vmatprep.subr.mxu0 0.0
    %569 = vmatpush1.msra.mxu0 %v543
    %570 = vmatprep.subr.mxu0 0.0
    %571 = vmatpush1.msra.mxu0 %v544
    %572 = vmatprep.subr.mxu0 0.0
    %573 = vmatpush1.msra.mxu0 %v545
    %574 = vmatprep.subr.mxu0 0.0
    %575 = vmatpush1.msra.mxu0 %v546
    %576 = vmatprep.subr.mxu0 0.0
    %577 = vmatpush1.msra.mxu0 %v547
    %578 = vmatprep.subr.mxu0 0.0
    %579 = vmatpush1.msra.mxu0 %v548
    %580 = vmatprep.subr.mxu0 0.0
    %581 = vmatpush1.msra.mxu0 %v549
    %582 = vmatprep.subr.mxu0 0.0
    %583 = vmatpush1.msra.mxu0 %v550
    %584 = vmatprep.subr.mxu0 0.0
    %585 = vmatpush1.msra.mxu0 %v551
    %586 = vmatprep.subr.mxu0 0.0
    %587 = vmatpush1.msra.mxu0 %v552
    %588 = vmatprep.subr.mxu0 0.0
    %589 = vmatpush1.msra.mxu0 %v553
    %590 = vmatprep.subr.mxu0 0.0
    %591 = vmatpush1.msra.mxu0 %v554
    %592 = vmatprep.subr.mxu0 0.0
    %593 = vmatpush1.msra.mxu0 0.0
    %594 = vmatprep.subr.mxu0 0.0
    %595 = vmatpush1.msra.mxu0 0.0
    %596 = vmatprep.subr.mxu0 0.0
    %597 = vmatpush1.msra.mxu0 0.0
    %598 = vmatprep.subr.mxu0 0.0
    %599 = vmatpush1.msra.mxu0 0.0
    %600 = vmatprep.subr.mxu0 0.0
    %601 = vmatpush1.msra.mxu0 0.0
    %602 = vmatprep.subr.mxu0 0.0
    %603 = vmatpush1.msra.mxu0 0.0
    %604 = vmatprep.subr.mxu0 0.0
    %605 = vmatpush1.msra.mxu0 0.0
    %606 = vmatprep.subr.mxu0 0.0
    %607 = vmatpush1.msra.mxu0 0.0
    %608 = vmatprep.subr.mxu0 0.0
    %609 = vmatpush1.msra.mxu0 0.0
    %610 = vmatprep.subr.mxu0 0.0
    %611 = vmatpush1.msra.mxu0 0.0
    %612 = vmatprep.subr.mxu0 0.0
    %613 = vmatpush1.msra.mxu0 0.0
    %614 = vmatprep.subr.mxu0 0.0
    %615 = vmatpush1.msra.mxu0 0.0
    %616 = vmatprep.subr.mxu0 0.0
    %617 = vmatpush1.msra.mxu0 0.0
    %618 = vmatprep.subr.mxu0 0.0
    %619 = vmatpush1.msra.mxu0 0.0
    %620 = vmatprep.subr.mxu0 0.0
    %621 = vmatpush1.msra.mxu0 0.0
    %622 = vmatprep.subr.mxu0 0.0
    %623 = vmatpush1.msra.mxu0 0.0
    %624 = vmatprep.mubr.f32.mxu0 0.0
    %625 = vmatmul.mubr.f32.gmra.mrb[0].mxu0 %v537
    %v626 = vpop.f32.mrb[0].mxu0
    %v627 = vadd.f32 %v559, %v626
    %v628 = vpop.f32.mrb[0].mxu0
    %629 = vdwg.mxu0
    %630 = vst [vmem:[#allocation11] sm:$0xff] %v627
    // Predicated region
    $region38: #{tpu_custom_call.1} parent=1 // pred_check
      _
    $region39: #{tpu_custom_call.1} parent=1 // pred_check_branch
      %632 = sbr.rel (0) target = $region41
    $region40: #{tpu_custom_call.1} parent=1 // pred_region
      %s634 = ssub.s32 128, 128
      %635 = vsyncadd [#allocation4], %s634
      %s637 = sshll.u32 [#allocation10], 4
      %s638 = int_to_ptr.vmem [resolvable:$true] %s637
      %640 = dma.vmem_to_hbm [thread:$0]  %s638, 128, %s5, [#allocation4]
    $region41: #{tpu_custom_call.1} parent=1 // pred_fallthru
      _
    // Predicated region
    $region42: #{tpu_custom_call.1} parent=1 // pred_check
      _
    $region43: #{tpu_custom_call.1} parent=1 // pred_check_branch
      %642 = sbr.rel (0) target = $region45
    $region44: #{tpu_custom_call.1} parent=1 // pred_region
      %s644 = ssub.s32 128, 128
      %645 = vsyncadd [#allocation12], %s644
      %s647 = sshll.u32 [#allocation11], 4
      %s648 = int_to_ptr.vmem [resolvable:$true] %s647
      %650 = dma.vmem_to_hbm [thread:$0]  %s648, 128, %s6, [#allocation12]
    $region45: #{tpu_custom_call.1} parent=1 // pred_fallthru
      _
    // Predicated region
    $region46: #{tpu_custom_call.1} parent=1 // pred_check
      _
    $region47: #{tpu_custom_call.1} parent=1 // pred_check_branch
      %652 = sbr.rel (0) target = $region49
    $region48: #{tpu_custom_call.1} parent=1 // pred_region
      %653 = dma.done [#allocation4], 128
    $region49: #{tpu_custom_call.1} parent=1 // pred_fallthru
      _
    // Predicated region
    $region50: #{tpu_custom_call.1} parent=1 // pred_check
      _
    $region51: #{tpu_custom_call.1} parent=1 // pred_check_branch
      %655 = sbr.rel (0) target = $region53
    $region52: #{tpu_custom_call.1} parent=1 // pred_region
      %656 = dma.done [#allocation12], 128
    $region53: #{tpu_custom_call.1} parent=1 // pred_fallthru
      _
    %657 = vsyncpa [#allocation3], 1
    %658 = vsyncpa [#allocation6], 1
    %659 = vsyncpa [#allocation9], 1
    %660 = vsyncpa [#allocation4], 1
    %661 = vsyncpa [#allocation12], 1

</llo_original>
